<compile_context>
chip_gen: v5e
topology: v5e:2x2
jax: 0.10.0
libtpu: 0.0.40
codegen_flags: <defaults>
</compile_context>

<pallas_src>
import jax
import jax.numpy as jnp
from jax.experimental import pallas as pl
from jax.experimental.pallas import tpu as pltpu


def rnn_cell_kernel(x_ref, h_ref, w1_ref, b1_ref, w2_ref, b2_ref, out_ref):
    # Static, sublane-aligned split of the i2h weight inside the kernel:
    # cat([x, h], -1) @ W  ==  x @ W[:I] + h @ W[I:]  (no lane concat, no
    # wrapper-side slices).
    I = x_ref.shape[1]
    xw = jnp.dot(x_ref[...], w1_ref[:I, :], preferred_element_type=jnp.float32)
    hw = jnp.dot(h_ref[...], w1_ref[I:, :], preferred_element_type=jnp.float32)
    i2h = jnp.tanh(xw + hw + b1_ref[...])                              # [B, H]
    # h2o linear
    out = jnp.dot(i2h, w2_ref[...], preferred_element_type=jnp.float32)
    out_ref[...] = (out + b2_ref[...]).astype(out_ref.dtype)           # [B, O]


@jax.jit
def rnn_cell_forward(x, hidden, w_i2h, b_i2h, w_h2o, b_h2o):
    """x: [B, I], hidden: [B, H].
    w_i2h: [I+H, H] (transposed PyTorch Linear weight), b_i2h: [H]
    w_h2o: [H, O],  b_h2o: [O]
    Returns output: [B, O]  (same as Model.forward)."""
    B, _ = x.shape
    H = hidden.shape[1]
    O = w_h2o.shape[1]

    # Bias reshapes fuse under jit with the pallas_call dispatch.
    b1 = b_i2h.reshape(1, H)
    b2 = b_h2o.reshape(1, O)

    vmem = pl.BlockSpec(memory_space=pltpu.MemorySpace.VMEM)

    # TODO(synk): if this cell is ever run over a timestep sequence / large
    # batch, fuse that loop into the kernel (grid axis "arbitrary", hidden
    # state in a VMEM scratch, weights resident) and mark the independent axis
    # "parallel" for v7x's two TensorCores.
    return pl.pallas_call(
        rnn_cell_kernel,
        out_shape=jax.ShapeDtypeStruct((B, O), jnp.float32),
        in_specs=[vmem] * 6,
        out_specs=vmem,
    )(x, hidden, w_i2h, b1, w_h2o, b2)


def reference_forward(x, hidden, w_i2h, b_i2h, w_h2o, b_h2o):
    combined = jnp.concatenate([x, hidden], axis=1)
    i2h = jnp.tanh(combined @ w_i2h + b_i2h)
    return i2h @ w_h2o + b_h2o


if __name__ == "__main__":
    # small shapes consistent with the module: batch fixed at 8 (initial_hidden rows)
    batch = 8
    input_size = 32
    hidden_size = 32
    output_size = 16

    key = jax.random.PRNGKey(0)
    k_x, k_h, k_w1, k_b1, k_w2, k_b2 = jax.random.split(key, 6)

    x = jax.random.normal(k_x, (batch, input_size), dtype=jnp.float32)
    # deterministic stand-in for nn.Parameter(torch.randn((8, hidden_size)))
    initial_hidden = jax.random.normal(k_h, (batch, hidden_size), dtype=jnp.float32)

    # deterministic stand-ins for nn.Linear weights/biases
    # (stored pre-transposed: [in_features, out_features])
    w_i2h = jax.random.normal(k_w1, (input_size + hidden_size, hidden_size),
                              dtype=jnp.float32) * 0.1
    b_i2h = jax.random.normal(k_b1, (hidden_size,), dtype=jnp.float32) * 0.1
    w_h2o = jax.random.normal(k_w2, (hidden_size, output_size),
                              dtype=jnp.float32) * 0.1
    b_h2o = jax.random.normal(k_b2, (output_size,), dtype=jnp.float32) * 0.1

    out = rnn_cell_forward(x, initial_hidden, w_i2h, b_i2h, w_h2o, b_h2o)
    out = jax.block_until_ready(out)

    ref = reference_forward(x, initial_hidden, w_i2h, b_i2h, w_h2o, b_h2o)
    assert out.shape == (batch, output_size)
    assert jnp.allclose(out, ref, atol=1e-5, rtol=1e-5)

    print("KERNEL_OK")
</pallas_src>

<mosaic_0001>
module attributes {stable_mosaic.version = 11 : i64} {
  func.func @rnn_cell_kernel(%arg0: memref<8x32xf32, #tpu.memory_space<vmem>>, %arg1: memref<8x32xf32, #tpu.memory_space<vmem>>, %arg2: memref<64x32xf32, #tpu.memory_space<vmem>>, %arg3: memref<1x32xf32, #tpu.memory_space<vmem>>, %arg4: memref<32x16xf32, #tpu.memory_space<vmem>>, %arg5: memref<1x16xf32, #tpu.memory_space<vmem>>, %arg6: memref<8x16xf32, #tpu.memory_space<vmem>>) attributes {dimension_semantics = [], scalar_prefetch = 0 : i64, scratch_operands = 0 : i64, tpu.core_type = #tpu.core_type<tc>} {
    %c0 = arith.constant 0 : index
    %c0_0 = arith.constant 0 : index
    %0 = vector.load %arg0[%c0, %c0_0] : memref<8x32xf32, #tpu.memory_space<vmem>>, vector<8x32xf32>
    %c0_1 = arith.constant 0 : index
    %c0_2 = arith.constant 0 : index
    %1 = vector.load %arg2[%c0_1, %c0_2] : memref<64x32xf32, #tpu.memory_space<vmem>>, vector<32x32xf32>
    %cst = arith.constant dense<0.000000e+00> : vector<8x32xf32>
    %2 = tpu.matmul %0, %1, %cst {dimension_numbers = #tpu.dot_dimension_numbers<[1], [0], [0], [1], [0, 0, 1, 1], [], []>} : vector<8x32xf32>, vector<32x32xf32>, vector<8x32xf32> -> vector<8x32xf32>
    %c0_3 = arith.constant 0 : index
    %c0_4 = arith.constant 0 : index
    %3 = vector.load %arg1[%c0_3, %c0_4] : memref<8x32xf32, #tpu.memory_space<vmem>>, vector<8x32xf32>
    %c32 = arith.constant 32 : index
    %c0_5 = arith.constant 0 : index
    %4 = vector.load %arg2[%c32, %c0_5] : memref<64x32xf32, #tpu.memory_space<vmem>>, vector<32x32xf32>
    %cst_6 = arith.constant dense<0.000000e+00> : vector<8x32xf32>
    %5 = tpu.matmul %3, %4, %cst_6 {dimension_numbers = #tpu.dot_dimension_numbers<[1], [0], [0], [1], [0, 0, 1, 1], [], []>} : vector<8x32xf32>, vector<32x32xf32>, vector<8x32xf32> -> vector<8x32xf32>
    %6 = arith.addf %2, %5 : vector<8x32xf32>
    %c0_7 = arith.constant 0 : index
    %c0_8 = arith.constant 0 : index
    %7 = vector.load %arg3[%c0_7, %c0_8] : memref<1x32xf32, #tpu.memory_space<vmem>>, vector<1x32xf32>
    %8 = vector.broadcast %7 : vector<1x32xf32> to vector<8x32xf32>
    %9 = arith.addf %6, %8 : vector<8x32xf32>
    %10 = math.tanh %9 : vector<8x32xf32>
    %c0_9 = arith.constant 0 : index
    %c0_10 = arith.constant 0 : index
    %11 = vector.load %arg4[%c0_9, %c0_10] : memref<32x16xf32, #tpu.memory_space<vmem>>, vector<32x16xf32>
    %cst_11 = arith.constant dense<0.000000e+00> : vector<8x16xf32>
    %12 = tpu.matmul %10, %11, %cst_11 {dimension_numbers = #tpu.dot_dimension_numbers<[1], [0], [0], [1], [0, 0, 1, 1], [], []>} : vector<8x32xf32>, vector<32x16xf32>, vector<8x16xf32> -> vector<8x16xf32>
    %c0_12 = arith.constant 0 : index
    %c0_13 = arith.constant 0 : index
    %13 = vector.load %arg5[%c0_12, %c0_13] : memref<1x16xf32, #tpu.memory_space<vmem>>, vector<1x16xf32>
    %14 = vector.broadcast %13 : vector<1x16xf32> to vector<8x16xf32>
    %15 = arith.addf %12, %14 : vector<8x16xf32>
    %c0_14 = arith.constant 0 : index
    %c0_15 = arith.constant 0 : index
    %16 = vector.load %arg6[%c0_14, %c0_15] : memref<8x16xf32, #tpu.memory_space<vmem>>, vector<8x16xf32>
    tpu.vector_store %arg6[%c0_14, %c0_15], %15 {strides = array<i32>} : memref<8x16xf32, #tpu.memory_space<vmem>>, vector<8x16xf32>,
    return
  }
}

</mosaic_0001>

<llo_original>
// kernel: rnn_cell_forward.1
$region0: #{rnn_cell_forward.1}
  #allocation0 [shape = 'u32[]', space=smem, size = 0x4, offset = 0x4, fixed_abs, tag = 'smem constant byte address 0x4 - core index']
  #allocation1 [shape = 'u32[72,128]{1,0:T(1,128)}', space=vmem, size = 0x9000, scoped, tag = 'internal scratch']
  %s0 = inlined_call_operand.vmem [shape: f32[8,32], index: 0, kind: input, shape index: {}]
  %s1 = inlined_call_operand.vmem [shape: f32[8,32], index: 1, kind: input, shape index: {}]
  %s2 = inlined_call_operand.vmem [shape: f32[64,32], index: 2, kind: input, shape index: {}]
  %s3 = inlined_call_operand.vmem [shape: f32[1,32], index: 3, kind: input, shape index: {}]
  %s4 = inlined_call_operand.vmem [shape: f32[32,16], index: 4, kind: input, shape index: {}]
  %s5 = inlined_call_operand.vmem [shape: f32[1,16], index: 5, kind: input, shape index: {}]
  %s6 = inlined_call_operand.hbm [shape: f32[8,16], index: 6, kind: output, shape index: {}]
  %s7 = sld [smem:[#allocation0]]
  $region34: #{rnn_cell_forward.1} parent=0
    _
  %s9 = ssub.s32 1, %s7
  %s10 = scalar_select 0, %s9, %s7
  $region1: #{rnn_cell_forward.1} parent=0
    #allocation2 [shape = 'u8[4096]{0}', space=vmem, size = 0x1000, scoped, tag = 'output window, operand 0, single buffered']
    #allocation3 [shape = 's32[1]{0}', space=sflag, size = 0x4, scoped, tag = 'scoped memory for rnn_cell_forward.1']
    %11 = vsyncpa [#allocation3], 0
    // Predicated region
    $region2: #{rnn_cell_forward.1} parent=1 // pred_check
      _
    $region3: #{rnn_cell_forward.1} parent=1 // pred_check_branch
      %13 = sbr.rel (0) target = $region5
    $region4: #{rnn_cell_forward.1} parent=1 // pred_region
      _
    $region5: #{rnn_cell_forward.1} parent=1 // pred_fallthru
      _
    // Predicated region
    $region6: #{rnn_cell_forward.1} parent=1 // pred_check
      _
    $region7: #{rnn_cell_forward.1} parent=1 // pred_check_branch
      %15 = sbr.rel (0) target = $region9
    $region8: #{rnn_cell_forward.1} parent=1 // pred_region
      _
    $region9: #{rnn_cell_forward.1} parent=1 // pred_fallthru
      _
    // Predicated region
    $region10: #{rnn_cell_forward.1} parent=1 // pred_check
      _
    $region11: #{rnn_cell_forward.1} parent=1 // pred_check_branch
      %17 = sbr.rel (0) target = $region13
    $region12: #{rnn_cell_forward.1} parent=1 // pred_region
      _
    $region13: #{rnn_cell_forward.1} parent=1 // pred_fallthru
      _
    // Predicated region
    $region14: #{rnn_cell_forward.1} parent=1 // pred_check
      _
    $region15: #{rnn_cell_forward.1} parent=1 // pred_check_branch
      %19 = sbr.rel (0) target = $region17
    $region16: #{rnn_cell_forward.1} parent=1 // pred_region
      _
    $region17: #{rnn_cell_forward.1} parent=1 // pred_fallthru
      _
    // Predicated region
    $region18: #{rnn_cell_forward.1} parent=1 // pred_check
      _
    $region19: #{rnn_cell_forward.1} parent=1 // pred_check_branch
      %21 = sbr.rel (0) target = $region21
    $region20: #{rnn_cell_forward.1} parent=1 // pred_region
      _
    $region21: #{rnn_cell_forward.1} parent=1 // pred_fallthru
      _
    // Predicated region
    $region22: #{rnn_cell_forward.1} parent=1 // pred_check
      _
    $region23: #{rnn_cell_forward.1} parent=1 // pred_check_branch
      %23 = sbr.rel (0) target = $region25
    $region24: #{rnn_cell_forward.1} parent=1 // pred_region
      _
    $region25: #{rnn_cell_forward.1} parent=1 // pred_fallthru
      _
    %v24 = vld [vmem:[%s0] sm:$0xff]
    %v25 = vld [vmem:[%s2] sm:$0xff]
    %v26 = vld [vmem:[%s2 + $0x8] sm:$0xff]
    %v27 = vld [vmem:[%s2 + $0x10] sm:$0xff]
    %v28 = vld [vmem:[%s2 + $0x18] sm:$0xff]
    %v29 = vld [vmem:[%s1] sm:$0xff]
    %v30 = vld [vmem:[%s2 + $0x20] sm:$0xff]
    %v31 = vld [vmem:[%s2 + $0x28] sm:$0xff]
    %v32 = vld [vmem:[%s2 + $0x30] sm:$0xff]
    %v33 = vld [vmem:[%s2 + $0x38] sm:$0xff]
    %vm34 = vcmask 261120
    %v36 = vsel %vm34, %v29, 0
    %38 = vmatpush.msra.mxu0 0.0
    %39 = vmatpush.msra.mxu0 0.0
    %40 = vmatpush.msra.mxu0 0.0
    %41 = vmatpush.msra.mxu0 0.0
    %42 = vmatpush.msra.mxu0 0.0
    %43 = vmatpush.msra.mxu0 0.0
    %44 = vmatpush.msra.mxu0 0.0
    %45 = vmatpush.msra.mxu0 0.0
    %46 = vmatpush.msra.mxu0 0.0
    %47 = vmatpush.msra.mxu0 0.0
    %48 = vmatpush.msra.mxu0 0.0
    %49 = vmatpush.msra.mxu0 0.0
    %50 = vmatpush.msra.mxu0 %v33
    %51 = vmatpush.msra.mxu0 %v32
    %52 = vmatpush.msra.mxu0 %v31
    %53 = vmatpush.msra.mxu0 %v30
    %54 = vmatmul.f32.gmra.mxu0 %v36
    %v55 = vpop.f32.mrf.mxu0
    %v56 = vadd.f32 0.0, %v55
    %57 = vdwg.mxu0
    %v59 = vsel %vm34, %v24, 0
    %61 = vmatpush.msra.mxu0 0.0
    %62 = vmatpush.msra.mxu0 0.0
    %63 = vmatpush.msra.mxu0 0.0
    %64 = vmatpush.msra.mxu0 0.0
    %65 = vmatpush.msra.mxu0 0.0
    %66 = vmatpush.msra.mxu0 0.0
    %67 = vmatpush.msra.mxu0 0.0
    %68 = vmatpush.msra.mxu0 0.0
    %69 = vmatpush.msra.mxu0 0.0
    %70 = vmatpush.msra.mxu0 0.0
    %71 = vmatpush.msra.mxu0 0.0
    %72 = vmatpush.msra.mxu0 0.0
    %73 = vmatpush.msra.mxu0 %v28
    %74 = vmatpush.msra.mxu0 %v27
    %75 = vmatpush.msra.mxu0 %v26
    %76 = vmatpush.msra.mxu0 %v25
    %77 = vmatmul.f32.gmra.mxu0 %v59
    %v78 = vpop.f32.mrf.mxu0
    %v79 = vadd.f32 %v56, %v78
    %80 = vdwg.mxu0
    %v81 = vld [vmem:[%s3] sm:$0x1]
    %v83 = vperm.slane %v81, 0
    %v85 = vadd.f32 %v79, %v83
    %v86 = vtanh.pop %v85
    %v87 = vld [vmem:[%s4] sm:$0xff]
    %v88 = vld [vmem:[%s4 + $0x8] sm:$0xff]
    %v89 = vld [vmem:[%s4 + $0x10] sm:$0xff]
    %v90 = vld [vmem:[%s4 + $0x18] sm:$0xff]
    %v91 = vld [vmem:[%s5] sm:$0x1]
    %v93 = vperm.slane %v91, 0
    %v96 = vsel %vm34, %v86, 0
    %98 = vmatpush.msra.mxu0 0.0
    %99 = vmatpush.msra.mxu0 0.0
    %100 = vmatpush.msra.mxu0 0.0
    %101 = vmatpush.msra.mxu0 0.0
    %102 = vmatpush.msra.mxu0 0.0
    %103 = vmatpush.msra.mxu0 0.0
    %104 = vmatpush.msra.mxu0 0.0
    %105 = vmatpush.msra.mxu0 0.0
    %106 = vmatpush.msra.mxu0 0.0
    %107 = vmatpush.msra.mxu0 0.0
    %108 = vmatpush.msra.mxu0 0.0
    %109 = vmatpush.msra.mxu0 0.0
    %110 = vmatpush.msra.mxu0 %v90
    %111 = vmatpush.msra.mxu0 %v89
    %112 = vmatpush.msra.mxu0 %v88
    %113 = vmatpush.msra.mxu0 %v87
    %114 = vmatmul.f32.gmra.mxu0 %v96
    %v115 = vpop.f32.mrf.mxu0
    %v116 = vadd.f32 %v93, %v115
    %117 = vdwg.mxu0
    %vm118 = vcmask 130048
    %119 = vst.msk [vmem:[#allocation2] sm:$0xff] %vm118, %v116
    // Predicated region
    $region26: #{rnn_cell_forward.1} parent=1 // pred_check
      _
    $region27: #{rnn_cell_forward.1} parent=1 // pred_check_branch
      %121 = sbr.rel (0) target = $region29
    $region28: #{rnn_cell_forward.1} parent=1 // pred_region
      %123 = vsyncadd [#allocation3], 0
      %s125 = sshll.u32 [#allocation2], 4
      %s126 = int_to_ptr.vmem [resolvable:$true] %s125
      %s127 = sshll.u32 %s6, 4
      %s128 = int_to_ptr.hbm [resolvable:$true] %s127
      %130 = dma.vmem_to_hbm [thread:$0]  %s126, 128, %s128, [#allocation3]
    $region29: #{rnn_cell_forward.1} parent=1 // pred_fallthru
      _
    // Predicated region
    $region30: #{rnn_cell_forward.1} parent=1 // pred_check
      _
    $region31: #{rnn_cell_forward.1} parent=1 // pred_check_branch
      %132 = sbr.rel (0) target = $region33
    $region32: #{rnn_cell_forward.1} parent=1 // pred_region
      %134 = dma.done [#allocation3], 128
    $region33: #{rnn_cell_forward.1} parent=1 // pred_fallthru
      _
    %135 = vsyncpa [#allocation3], 1

</llo_original>
